<compile_context>
chip_gen: v7x
topology: tpu7x:2x2x1
jax: 0.10.0
libtpu: 0.0.40
codegen_flags: <defaults>
</compile_context>

<pallas_src>
import math
from functools import partial

import jax
import jax.numpy as jnp
from jax.experimental import pallas as pl
from jax.experimental.pallas import tpu as pltpu

_LANES = 128


def _softplus(v, beta=10.0, threshold=2.0):
    # Matches torch.nn.Softplus(beta=10, threshold=2): reverts to the
    # identity when beta * v > threshold.  The min() clamp keeps the
    # not-taken branch of the where() finite.
    bv = beta * v
    return jnp.where(
        bv > threshold,
        v,
        jnp.log1p(jnp.exp(jnp.minimum(bv, threshold))) / beta,
    )


def _make_kernel(hemisphere_radius: float, halfpowerlaw: int):
    R = float(hemisphere_radius)
    inv_R = 1.0 / R
    p = int(halfpowerlaw)
    inoutlet_shift = R / 2.0
    inoutlet_radius = R / 4.0

    def kernel(x_ref, o_ref):
        # x_ref: (3, TR, 128)  planes = (x, y, z)       -- VMEM tile
        # o_ref: (10, TR, 128) planes = the 10 outputs  -- VMEM tile
        xc = x_ref[0]          # dense (TR, 128) slabs
        yc = x_ref[1]
        zc = x_ref[2]

        cline = -zc * inv_R
        cl_r_x = xc * inv_R
        cl_r_y = yc * inv_R
        o_ref[1] = cline
        o_ref[2] = cl_r_x
        o_ref[3] = cl_r_y

        split_z_sqratio = 1.0 - jnp.maximum(cline, 0.0) ** 2
        dissq_wall = split_z_sqratio - cl_r_x * cl_r_x - cl_r_y * cl_r_y
        o_ref[7] = split_z_sqratio
        o_ref[0] = dissq_wall

        shift_adj = inoutlet_shift * cline * 0.5
        dissqfromorigin = jnp.maximum(-cline * 0.5, 0.0) ** 2
        o_ref[8] = dissqfromorigin

        spreading_radius = (
            inoutlet_radius + (R - inoutlet_radius) * (1.0 - dissqfromorigin)
        )
        # One exact reciprocal, shared by the four divides of the module.
        inv_sr = 1.0 / spreading_radius
        inv_sr2 = inv_sr * inv_sr

        x_minus = xc - shift_adj
        il_r_x = _softplus(2.0 - _softplus(1.0 - x_minus * inv_sr)) - 1.0
        il_r_y = _softplus(2.0 - _softplus(1.0 - yc * inv_sr)) - 1.0
        o_ref[4] = il_r_x
        o_ref[5] = il_r_y
        o_ref[6] = il_r_x  # ol_r_x is the identical expression in the module

        y_sq_term = (yc * yc) * inv_sr2
        inlet = 1.0 - _softplus(1.0 - (x_minus * x_minus + y_sq_term) ** p)
        x_plus = xc + shift_adj
        outlet = 1.0 - _softplus(1.0 - (x_plus * x_plus + y_sq_term) ** p)

        hb = (1.0 - (1.0 - dissq_wall) ** p) * (
            1.0 - dissqfromorigin ** p * inlet * outlet
        )
        o_ref[9] = hb

    return kernel


@partial(jax.jit, static_argnames=("longlength", "halfpowerlaw", "tile_rows"))
def heart_chamber(x, longlength=2.0, halfpowerlaw=4, tile_rows=512):
    """x: (..., 3) -> (..., 10) float32, matching HeartChamber.forward."""
    hemisphere_radius = longlength / 2.0
    lead = x.shape[:-1]
    assert x.shape[-1] == 3
    n = int(math.prod(lead)) if lead else 1

    # Sublane-aligned row tile: keep big tiles for large N, shrink (to a
    # multiple of 8) for tiny inputs so we don't over-pad.
    rows_needed = pl.cdiv(n, _LANES)
    tr = min(int(tile_rows), max(8, ((rows_needed + 7) // 8) * 8))
    tr = ((tr + 7) // 8) * 8
    rows = pl.cdiv(rows_needed, tr) * tr
    n_pad = rows * _LANES

    # (..., 3) -> (3, N) -> pad -> (3, rows, 128).  All of this lives inside
    # the same jit as the pallas_call so XLA fuses the layout plumbing.
    xf = jnp.transpose(x.reshape(n, 3)).astype(jnp.float32)        # (3, N)
    if n_pad != n:
        xf = jnp.pad(xf, ((0, 0), (0, n_pad - n)))                 # (3, n_pad)
    xf = xf.reshape(3, rows, _LANES)                               # contiguous

    kernel = _make_kernel(hemisphere_radius, halfpowerlaw)

    out = pl.pallas_call(
        kernel,
        out_shape=jax.ShapeDtypeStruct((10, rows, _LANES), jnp.float32),
        grid_spec=pltpu.PrefetchScalarGridSpec(
            num_scalar_prefetch=0,
            grid=(rows // tr,),
            in_specs=[pl.BlockSpec((3, tr, _LANES), lambda i: (0, i, 0))],
            out_specs=pl.BlockSpec((10, tr, _LANES), lambda i: (0, i, 0)),
        ),
        compiler_params=pltpu.CompilerParams(
            dimension_semantics=("parallel",)),
    )(xf)

    out = out.reshape(10, n_pad)[:, :n]
    out = jnp.transpose(out)                                       # (N, 10)
    return out.reshape(lead + (10,))


def _reference(x, longlength=2.0, halfpowerlaw=4):
    """Pure-JAX transcription of the PyTorch forward, for verification."""
    R = longlength / 2.0
    p = int(halfpowerlaw)
    inoutlet_shift = R / 2.0
    inoutlet_radius = R / 4.0
    xc, yc, zc = x[..., 0:1], x[..., 1:2], x[..., 2:3]
    cline = -zc / R
    cl_r_x = xc / R
    cl_r_y = yc / R
    split_z_sqratio = 1.0 - jnp.maximum(cline, 0.0) ** 2
    dissq_wall = split_z_sqratio - cl_r_x ** 2 - cl_r_y ** 2
    shift_adj = inoutlet_shift * cline / 2.0
    dfo = jnp.maximum(-cline / 2.0, 0.0) ** 2
    sr = inoutlet_radius + (R - inoutlet_radius) * (1.0 - dfo)
    il_r_x = _softplus(2.0 - _softplus(1.0 - (xc - shift_adj) / sr)) - 1.0
    ol_r_x = il_r_x
    il_r_y = _softplus(2.0 - _softplus(1.0 - yc / sr)) - 1.0
    inlet = 1.0 - _softplus(1.0 - ((xc - shift_adj) ** 2 + yc ** 2 / sr ** 2) ** p)
    outlet = 1.0 - _softplus(1.0 - ((xc + shift_adj) ** 2 + yc ** 2 / sr ** 2) ** p)
    hb = (1.0 - (1.0 - dissq_wall) ** p) * (1.0 - dfo ** p * inlet * outlet)
    return jnp.concatenate(
        (dissq_wall, cline, cl_r_x, cl_r_y, il_r_x, il_r_y, ol_r_x,
         split_z_sqratio, dfo, hb), axis=-1)


if __name__ == "__main__":
    key = jax.random.PRNGKey(0)
    # batch=2, points=256, coords=3  (x, y, z)
    x = jax.random.uniform(key, (2, 256, 3), dtype=jnp.float32,
                           minval=-1.0, maxval=1.0)

    longlength = 2.0       # -> hemisphere_radius = 1.0
    halfpowerlaw = 4

    out = heart_chamber(x, longlength=longlength, halfpowerlaw=halfpowerlaw)
    out = jax.block_until_ready(out)

    ref = _reference(x, longlength=longlength, halfpowerlaw=halfpowerlaw)
    assert out.shape == (2, 256, 10), out.shape
    err = float(jnp.max(jnp.abs(out - ref)))
    assert err < 1e-5, err

    print("KERNEL_OK")
</pallas_src>

<mosaic_0001>
module attributes {stable_mosaic.version = 11 : i64} {
  func.func @kernel(%arg0: i32, %arg1: memref<3x8x128xf32, #tpu.memory_space<vmem>>, %arg2: memref<10x8x128xf32, #tpu.memory_space<vmem>>) attributes {dimension_semantics = [#tpu.dimension_semantics<parallel>], iteration_bounds = array<i64: 1>, scalar_prefetch = 0 : i64, scratch_operands = 0 : i64, tpu.core_type = #tpu.core_type<tc>, window_params = [{transform_indices = @transform_0, window_bounds = array<i64: 3, 8, 128>}, {transform_indices = @transform_1, window_bounds = array<i64: 10, 8, 128>}]} {
    %c0 = arith.constant 0 : index
    %c0_0 = arith.constant 0 : index
    %c0_1 = arith.constant 0 : index
    %0 = vector.load %arg1[%c0, %c0_0, %c0_1] : memref<3x8x128xf32, #tpu.memory_space<vmem>>, vector<1x8x128xf32>
    %1 = vector.shape_cast %0 : vector<1x8x128xf32> to vector<8x128xf32>
    %c1 = arith.constant 1 : index
    %c0_2 = arith.constant 0 : index
    %c0_3 = arith.constant 0 : index
    %2 = vector.load %arg1[%c1, %c0_2, %c0_3] : memref<3x8x128xf32, #tpu.memory_space<vmem>>, vector<1x8x128xf32>
    %3 = vector.shape_cast %2 : vector<1x8x128xf32> to vector<8x128xf32>
    %c2 = arith.constant 2 : index
    %c0_4 = arith.constant 0 : index
    %c0_5 = arith.constant 0 : index
    %4 = vector.load %arg1[%c2, %c0_4, %c0_5] : memref<3x8x128xf32, #tpu.memory_space<vmem>>, vector<1x8x128xf32>
    %5 = vector.shape_cast %4 : vector<1x8x128xf32> to vector<8x128xf32>
    %cst = arith.constant 0.000000e+00 : f32
    %6 = vector.broadcast %cst : f32 to vector<8x128xf32>
    %7 = arith.subf %6, %5 : vector<8x128xf32>
    %cst_6 = arith.constant 1.000000e+00 : f32
    %8 = vector.broadcast %cst_6 : f32 to vector<8x128xf32>
    %9 = arith.mulf %7, %8 : vector<8x128xf32>
    %cst_7 = arith.constant 1.000000e+00 : f32
    %10 = vector.broadcast %cst_7 : f32 to vector<8x128xf32>
    %11 = arith.mulf %1, %10 : vector<8x128xf32>
    %cst_8 = arith.constant 1.000000e+00 : f32
    %12 = vector.broadcast %cst_8 : f32 to vector<8x128xf32>
    %13 = arith.mulf %3, %12 : vector<8x128xf32>
    %c1_9 = arith.constant 1 : index
    %c0_10 = arith.constant 0 : index
    %c0_11 = arith.constant 0 : index
    %14 = vector.load %arg2[%c1_9, %c0_10, %c0_11] : memref<10x8x128xf32, #tpu.memory_space<vmem>>, vector<1x8x128xf32>
    %15 = vector.shape_cast %14 : vector<1x8x128xf32> to vector<8x128xf32>
    %16 = vector.shape_cast %9 : vector<8x128xf32> to vector<1x8x128xf32>
    tpu.vector_store %arg2[%c1_9, %c0_10, %c0_11], %16 {strides = array<i32>} : memref<10x8x128xf32, #tpu.memory_space<vmem>>, vector<1x8x128xf32>,
    %c2_12 = arith.constant 2 : index
    %c0_13 = arith.constant 0 : index
    %c0_14 = arith.constant 0 : index
    %17 = vector.load %arg2[%c2_12, %c0_13, %c0_14] : memref<10x8x128xf32, #tpu.memory_space<vmem>>, vector<1x8x128xf32>
    %18 = vector.shape_cast %17 : vector<1x8x128xf32> to vector<8x128xf32>
    %19 = vector.shape_cast %11 : vector<8x128xf32> to vector<1x8x128xf32>
    tpu.vector_store %arg2[%c2_12, %c0_13, %c0_14], %19 {strides = array<i32>} : memref<10x8x128xf32, #tpu.memory_space<vmem>>, vector<1x8x128xf32>,
    %c3 = arith.constant 3 : index
    %c0_15 = arith.constant 0 : index
    %c0_16 = arith.constant 0 : index
    %20 = vector.load %arg2[%c3, %c0_15, %c0_16] : memref<10x8x128xf32, #tpu.memory_space<vmem>>, vector<1x8x128xf32>
    %21 = vector.shape_cast %20 : vector<1x8x128xf32> to vector<8x128xf32>
    %22 = vector.shape_cast %13 : vector<8x128xf32> to vector<1x8x128xf32>
    tpu.vector_store %arg2[%c3, %c0_15, %c0_16], %22 {strides = array<i32>} : memref<10x8x128xf32, #tpu.memory_space<vmem>>, vector<1x8x128xf32>,
    %cst_17 = arith.constant 0.000000e+00 : f32
    %23 = vector.broadcast %cst_17 : f32 to vector<8x128xf32>
    %24 = arith.maximumf %9, %23 : vector<8x128xf32>
    %25 = arith.mulf %24, %24 : vector<8x128xf32>
    %cst_18 = arith.constant 1.000000e+00 : f32
    %26 = vector.broadcast %cst_18 : f32 to vector<8x128xf32>
    %27 = arith.subf %26, %25 : vector<8x128xf32>
    %28 = arith.mulf %11, %11 : vector<8x128xf32>
    %29 = arith.subf %27, %28 : vector<8x128xf32>
    %30 = arith.mulf %13, %13 : vector<8x128xf32>
    %31 = arith.subf %29, %30 : vector<8x128xf32>
    %c7 = arith.constant 7 : index
    %c0_19 = arith.constant 0 : index
    %c0_20 = arith.constant 0 : index
    %32 = vector.load %arg2[%c7, %c0_19, %c0_20] : memref<10x8x128xf32, #tpu.memory_space<vmem>>, vector<1x8x128xf32>
    %33 = vector.shape_cast %32 : vector<1x8x128xf32> to vector<8x128xf32>
    %34 = vector.shape_cast %27 : vector<8x128xf32> to vector<1x8x128xf32>
    tpu.vector_store %arg2[%c7, %c0_19, %c0_20], %34 {strides = array<i32>} : memref<10x8x128xf32, #tpu.memory_space<vmem>>, vector<1x8x128xf32>,
    %c0_21 = arith.constant 0 : index
    %c0_22 = arith.constant 0 : index
    %c0_23 = arith.constant 0 : index
    %35 = vector.load %arg2[%c0_21, %c0_22, %c0_23] : memref<10x8x128xf32, #tpu.memory_space<vmem>>, vector<1x8x128xf32>
    %36 = vector.shape_cast %35 : vector<1x8x128xf32> to vector<8x128xf32>
    %37 = vector.shape_cast %31 : vector<8x128xf32> to vector<1x8x128xf32>
    tpu.vector_store %arg2[%c0_21, %c0_22, %c0_23], %37 {strides = array<i32>} : memref<10x8x128xf32, #tpu.memory_space<vmem>>, vector<1x8x128xf32>,
    %cst_24 = arith.constant 5.000000e-01 : f32
    %38 = vector.broadcast %cst_24 : f32 to vector<8x128xf32>
    %39 = arith.mulf %38, %9 : vector<8x128xf32>
    %cst_25 = arith.constant 5.000000e-01 : f32
    %40 = vector.broadcast %cst_25 : f32 to vector<8x128xf32>
    %41 = arith.mulf %39, %40 : vector<8x128xf32>
    %cst_26 = arith.constant 0.000000e+00 : f32
    %42 = vector.broadcast %cst_26 : f32 to vector<8x128xf32>
    %43 = arith.subf %42, %9 : vector<8x128xf32>
    %cst_27 = arith.constant 5.000000e-01 : f32
    %44 = vector.broadcast %cst_27 : f32 to vector<8x128xf32>
    %45 = arith.mulf %43, %44 : vector<8x128xf32>
    %cst_28 = arith.constant 0.000000e+00 : f32
    %46 = vector.broadcast %cst_28 : f32 to vector<8x128xf32>
    %47 = arith.maximumf %45, %46 : vector<8x128xf32>
    %48 = arith.mulf %47, %47 : vector<8x128xf32>
    %c8 = arith.constant 8 : index
    %c0_29 = arith.constant 0 : index
    %c0_30 = arith.constant 0 : index
    %49 = vector.load %arg2[%c8, %c0_29, %c0_30] : memref<10x8x128xf32, #tpu.memory_space<vmem>>, vector<1x8x128xf32>
    %50 = vector.shape_cast %49 : vector<1x8x128xf32> to vector<8x128xf32>
    %51 = vector.shape_cast %48 : vector<8x128xf32> to vector<1x8x128xf32>
    tpu.vector_store %arg2[%c8, %c0_29, %c0_30], %51 {strides = array<i32>} : memref<10x8x128xf32, #tpu.memory_space<vmem>>, vector<1x8x128xf32>,
    %cst_31 = arith.constant 1.000000e+00 : f32
    %52 = vector.broadcast %cst_31 : f32 to vector<8x128xf32>
    %53 = arith.subf %52, %48 : vector<8x128xf32>
    %cst_32 = arith.constant 7.500000e-01 : f32
    %54 = vector.broadcast %cst_32 : f32 to vector<8x128xf32>
    %55 = arith.mulf %54, %53 : vector<8x128xf32>
    %cst_33 = arith.constant 2.500000e-01 : f32
    %56 = vector.broadcast %cst_33 : f32 to vector<8x128xf32>
    %57 = arith.addf %56, %55 : vector<8x128xf32>
    %cst_34 = arith.constant 1.000000e+00 : f32
    %58 = vector.broadcast %cst_34 : f32 to vector<8x128xf32>
    %59 = arith.divf %58, %57 : vector<8x128xf32>
    %60 = arith.mulf %59, %59 : vector<8x128xf32>
    %61 = arith.subf %1, %41 : vector<8x128xf32>
    %62 = arith.mulf %61, %59 : vector<8x128xf32>
    %cst_35 = arith.constant 1.000000e+00 : f32
    %63 = vector.broadcast %cst_35 : f32 to vector<8x128xf32>
    %64 = arith.subf %63, %62 : vector<8x128xf32>
    %cst_36 = arith.constant 1.000000e+01 : f32
    %65 = vector.broadcast %cst_36 : f32 to vector<8x128xf32>
    %66 = arith.mulf %65, %64 : vector<8x128xf32>
    %cst_37 = arith.constant 2.000000e+00 : f32
    %67 = vector.broadcast %cst_37 : f32 to vector<8x128xf32>
    %68 = arith.cmpf ogt, %66, %67 : vector<8x128xf32>
    %cst_38 = arith.constant 2.000000e+00 : f32
    %69 = vector.broadcast %cst_38 : f32 to vector<8x128xf32>
    %70 = arith.minimumf %66, %69 : vector<8x128xf32>
    %71 = math.exp %70 : vector<8x128xf32>
    %72 = math.log1p %71 : vector<8x128xf32>
    %cst_39 = arith.constant 1.000000e+01 : f32
    %73 = vector.broadcast %cst_39 : f32 to vector<8x128xf32>
    %74 = arith.divf %72, %73 : vector<8x128xf32>
    %75 = arith.select %68, %64, %74 : vector<8x128xi1>, vector<8x128xf32>
    %cst_40 = arith.constant 2.000000e+00 : f32
    %76 = vector.broadcast %cst_40 : f32 to vector<8x128xf32>
    %77 = arith.subf %76, %75 : vector<8x128xf32>
    %cst_41 = arith.constant 1.000000e+01 : f32
    %78 = vector.broadcast %cst_41 : f32 to vector<8x128xf32>
    %79 = arith.mulf %78, %77 : vector<8x128xf32>
    %cst_42 = arith.constant 2.000000e+00 : f32
    %80 = vector.broadcast %cst_42 : f32 to vector<8x128xf32>
    %81 = arith.cmpf ogt, %79, %80 : vector<8x128xf32>
    %cst_43 = arith.constant 2.000000e+00 : f32
    %82 = vector.broadcast %cst_43 : f32 to vector<8x128xf32>
    %83 = arith.minimumf %79, %82 : vector<8x128xf32>
    %84 = math.exp %83 : vector<8x128xf32>
    %85 = math.log1p %84 : vector<8x128xf32>
    %cst_44 = arith.constant 1.000000e+01 : f32
    %86 = vector.broadcast %cst_44 : f32 to vector<8x128xf32>
    %87 = arith.divf %85, %86 : vector<8x128xf32>
    %88 = arith.select %81, %77, %87 : vector<8x128xi1>, vector<8x128xf32>
    %cst_45 = arith.constant 1.000000e+00 : f32
    %89 = vector.broadcast %cst_45 : f32 to vector<8x128xf32>
    %90 = arith.subf %88, %89 : vector<8x128xf32>
    %91 = arith.mulf %3, %59 : vector<8x128xf32>
    %cst_46 = arith.constant 1.000000e+00 : f32
    %92 = vector.broadcast %cst_46 : f32 to vector<8x128xf32>
    %93 = arith.subf %92, %91 : vector<8x128xf32>
    %cst_47 = arith.constant 1.000000e+01 : f32
    %94 = vector.broadcast %cst_47 : f32 to vector<8x128xf32>
    %95 = arith.mulf %94, %93 : vector<8x128xf32>
    %cst_48 = arith.constant 2.000000e+00 : f32
    %96 = vector.broadcast %cst_48 : f32 to vector<8x128xf32>
    %97 = arith.cmpf ogt, %95, %96 : vector<8x128xf32>
    %cst_49 = arith.constant 2.000000e+00 : f32
    %98 = vector.broadcast %cst_49 : f32 to vector<8x128xf32>
    %99 = arith.minimumf %95, %98 : vector<8x128xf32>
    %100 = math.exp %99 : vector<8x128xf32>
    %101 = math.log1p %100 : vector<8x128xf32>
    %cst_50 = arith.constant 1.000000e+01 : f32
    %102 = vector.broadcast %cst_50 : f32 to vector<8x128xf32>
    %103 = arith.divf %101, %102 : vector<8x128xf32>
    %104 = arith.select %97, %93, %103 : vector<8x128xi1>, vector<8x128xf32>
    %cst_51 = arith.constant 2.000000e+00 : f32
    %105 = vector.broadcast %cst_51 : f32 to vector<8x128xf32>
    %106 = arith.subf %105, %104 : vector<8x128xf32>
    %cst_52 = arith.constant 1.000000e+01 : f32
    %107 = vector.broadcast %cst_52 : f32 to vector<8x128xf32>
    %108 = arith.mulf %107, %106 : vector<8x128xf32>
    %cst_53 = arith.constant 2.000000e+00 : f32
    %109 = vector.broadcast %cst_53 : f32 to vector<8x128xf32>
    %110 = arith.cmpf ogt, %108, %109 : vector<8x128xf32>
    %cst_54 = arith.constant 2.000000e+00 : f32
    %111 = vector.broadcast %cst_54 : f32 to vector<8x128xf32>
    %112 = arith.minimumf %108, %111 : vector<8x128xf32>
    %113 = math.exp %112 : vector<8x128xf32>
    %114 = math.log1p %113 : vector<8x128xf32>
    %cst_55 = arith.constant 1.000000e+01 : f32
    %115 = vector.broadcast %cst_55 : f32 to vector<8x128xf32>
    %116 = arith.divf %114, %115 : vector<8x128xf32>
    %117 = arith.select %110, %106, %116 : vector<8x128xi1>, vector<8x128xf32>
    %cst_56 = arith.constant 1.000000e+00 : f32
    %118 = vector.broadcast %cst_56 : f32 to vector<8x128xf32>
    %119 = arith.subf %117, %118 : vector<8x128xf32>
    %c4 = arith.constant 4 : index
    %c0_57 = arith.constant 0 : index
    %c0_58 = arith.constant 0 : index
    %120 = vector.load %arg2[%c4, %c0_57, %c0_58] : memref<10x8x128xf32, #tpu.memory_space<vmem>>, vector<1x8x128xf32>
    %121 = vector.shape_cast %120 : vector<1x8x128xf32> to vector<8x128xf32>
    %122 = vector.shape_cast %90 : vector<8x128xf32> to vector<1x8x128xf32>
    tpu.vector_store %arg2[%c4, %c0_57, %c0_58], %122 {strides = array<i32>} : memref<10x8x128xf32, #tpu.memory_space<vmem>>, vector<1x8x128xf32>,
    %c5 = arith.constant 5 : index
    %c0_59 = arith.constant 0 : index
    %c0_60 = arith.constant 0 : index
    %123 = vector.load %arg2[%c5, %c0_59, %c0_60] : memref<10x8x128xf32, #tpu.memory_space<vmem>>, vector<1x8x128xf32>
    %124 = vector.shape_cast %123 : vector<1x8x128xf32> to vector<8x128xf32>
    %125 = vector.shape_cast %119 : vector<8x128xf32> to vector<1x8x128xf32>
    tpu.vector_store %arg2[%c5, %c0_59, %c0_60], %125 {strides = array<i32>} : memref<10x8x128xf32, #tpu.memory_space<vmem>>, vector<1x8x128xf32>,
    %c6 = arith.constant 6 : index
    %c0_61 = arith.constant 0 : index
    %c0_62 = arith.constant 0 : index
    %126 = vector.load %arg2[%c6, %c0_61, %c0_62] : memref<10x8x128xf32, #tpu.memory_space<vmem>>, vector<1x8x128xf32>
    %127 = vector.shape_cast %126 : vector<1x8x128xf32> to vector<8x128xf32>
    %128 = vector.shape_cast %90 : vector<8x128xf32> to vector<1x8x128xf32>
    tpu.vector_store %arg2[%c6, %c0_61, %c0_62], %128 {strides = array<i32>} : memref<10x8x128xf32, #tpu.memory_space<vmem>>, vector<1x8x128xf32>,
    %129 = arith.mulf %3, %3 : vector<8x128xf32>
    %130 = arith.mulf %129, %60 : vector<8x128xf32>
    %131 = arith.mulf %61, %61 : vector<8x128xf32>
    %132 = arith.addf %131, %130 : vector<8x128xf32>
    %133 = arith.mulf %132, %132 : vector<8x128xf32>
    %134 = arith.mulf %133, %133 : vector<8x128xf32>
    %cst_63 = arith.constant 1.000000e+00 : f32
    %135 = vector.broadcast %cst_63 : f32 to vector<8x128xf32>
    %136 = arith.subf %135, %134 : vector<8x128xf32>
    %cst_64 = arith.constant 1.000000e+01 : f32
    %137 = vector.broadcast %cst_64 : f32 to vector<8x128xf32>
    %138 = arith.mulf %137, %136 : vector<8x128xf32>
    %cst_65 = arith.constant 2.000000e+00 : f32
    %139 = vector.broadcast %cst_65 : f32 to vector<8x128xf32>
    %140 = arith.cmpf ogt, %138, %139 : vector<8x128xf32>
    %cst_66 = arith.constant 2.000000e+00 : f32
    %141 = vector.broadcast %cst_66 : f32 to vector<8x128xf32>
    %142 = arith.minimumf %138, %141 : vector<8x128xf32>
    %143 = math.exp %142 : vector<8x128xf32>
    %144 = math.log1p %143 : vector<8x128xf32>
    %cst_67 = arith.constant 1.000000e+01 : f32
    %145 = vector.broadcast %cst_67 : f32 to vector<8x128xf32>
    %146 = arith.divf %144, %145 : vector<8x128xf32>
    %147 = arith.select %140, %136, %146 : vector<8x128xi1>, vector<8x128xf32>
    %cst_68 = arith.constant 1.000000e+00 : f32
    %148 = vector.broadcast %cst_68 : f32 to vector<8x128xf32>
    %149 = arith.subf %148, %147 : vector<8x128xf32>
    %150 = arith.addf %1, %41 : vector<8x128xf32>
    %151 = arith.mulf %150, %150 : vector<8x128xf32>
    %152 = arith.addf %151, %130 : vector<8x128xf32>
    %153 = arith.mulf %152, %152 : vector<8x128xf32>
    %154 = arith.mulf %153, %153 : vector<8x128xf32>
    %cst_69 = arith.constant 1.000000e+00 : f32
    %155 = vector.broadcast %cst_69 : f32 to vector<8x128xf32>
    %156 = arith.subf %155, %154 : vector<8x128xf32>
    %cst_70 = arith.constant 1.000000e+01 : f32
    %157 = vector.broadcast %cst_70 : f32 to vector<8x128xf32>
    %158 = arith.mulf %157, %156 : vector<8x128xf32>
    %cst_71 = arith.constant 2.000000e+00 : f32
    %159 = vector.broadcast %cst_71 : f32 to vector<8x128xf32>
    %160 = arith.cmpf ogt, %158, %159 : vector<8x128xf32>
    %cst_72 = arith.constant 2.000000e+00 : f32
    %161 = vector.broadcast %cst_72 : f32 to vector<8x128xf32>
    %162 = arith.minimumf %158, %161 : vector<8x128xf32>
    %163 = math.exp %162 : vector<8x128xf32>
    %164 = math.log1p %163 : vector<8x128xf32>
    %cst_73 = arith.constant 1.000000e+01 : f32
    %165 = vector.broadcast %cst_73 : f32 to vector<8x128xf32>
    %166 = arith.divf %164, %165 : vector<8x128xf32>
    %167 = arith.select %160, %156, %166 : vector<8x128xi1>, vector<8x128xf32>
    %cst_74 = arith.constant 1.000000e+00 : f32
    %168 = vector.broadcast %cst_74 : f32 to vector<8x128xf32>
    %169 = arith.subf %168, %167 : vector<8x128xf32>
    %cst_75 = arith.constant 1.000000e+00 : f32
    %170 = vector.broadcast %cst_75 : f32 to vector<8x128xf32>
    %171 = arith.subf %170, %31 : vector<8x128xf32>
    %172 = arith.mulf %171, %171 : vector<8x128xf32>
    %173 = arith.mulf %172, %172 : vector<8x128xf32>
    %cst_76 = arith.constant 1.000000e+00 : f32
    %174 = vector.broadcast %cst_76 : f32 to vector<8x128xf32>
    %175 = arith.subf %174, %173 : vector<8x128xf32>
    %176 = arith.mulf %48, %48 : vector<8x128xf32>
    %177 = arith.mulf %176, %176 : vector<8x128xf32>
    %178 = arith.mulf %177, %149 : vector<8x128xf32>
    %179 = arith.mulf %178, %169 : vector<8x128xf32>
    %cst_77 = arith.constant 1.000000e+00 : f32
    %180 = vector.broadcast %cst_77 : f32 to vector<8x128xf32>
    %181 = arith.subf %180, %179 : vector<8x128xf32>
    %182 = arith.mulf %175, %181 : vector<8x128xf32>
    %c9 = arith.constant 9 : index
    %c0_78 = arith.constant 0 : index
    %c0_79 = arith.constant 0 : index
    %183 = vector.load %arg2[%c9, %c0_78, %c0_79] : memref<10x8x128xf32, #tpu.memory_space<vmem>>, vector<1x8x128xf32>
    %184 = vector.shape_cast %183 : vector<1x8x128xf32> to vector<8x128xf32>
    %185 = vector.shape_cast %182 : vector<8x128xf32> to vector<1x8x128xf32>
    tpu.vector_store %arg2[%c9, %c0_78, %c0_79], %185 {strides = array<i32>} : memref<10x8x128xf32, #tpu.memory_space<vmem>>, vector<1x8x128xf32>,
    return
  }
  func.func @transform_0(%arg0: i32) -> (i32, i32, i32) {
    %c0_i32 = arith.constant 0 : i32
    %c0_i32_0 = arith.constant 0 : i32
    %c0_i32_1 = arith.constant 0 : i32
    return %c0_i32, %arg0, %c0_i32_0 : i32, i32, i32
  }
  func.func @transform_1(%arg0: i32) -> (i32, i32, i32) {
    %c0_i32 = arith.constant 0 : i32
    %c0_i32_0 = arith.constant 0 : i32
    %c0_i32_1 = arith.constant 0 : i32
    return %c0_i32, %arg0, %c0_i32_0 : i32, i32, i32
  }
}

</mosaic_0001>

<llo_original>
// kernel: heart_chamber.1
$region0: #{heart_chamber.1}
  #allocation0 [shape = 'u32[]', space=smem, size = 0x4, offset = 0x4, fixed_abs, tag = 'smem constant byte address 0x4 - core index']
  #allocation1 [shape = 'u32[144,128]{1,0:T(1,128)}', space=vmem, size = 0x12000, scoped, tag = 'internal scratch']
  %s0 = inlined_call_operand.vmem [shape: f32[3,8,128], index: 0, kind: input, shape index: {}]
  %s1 = inlined_call_operand.vmem [shape: f32[10,8,128], index: 1, kind: output, shape index: {}]
  %s2 = sld [smem:[#allocation0]]
  $region14: #{heart_chamber.1} parent=0
    _
  %s4 = ssub.s32 1, %s2
  %s5 = scalar_select 0, %s4, %s2
  // Predicated region
  $region2: #{heart_chamber.1} parent=0 // pred_check
    _
  $region3: #{heart_chamber.1} parent=0 // pred_check_branch
    %7 = sbr.rel (0) target = $region5
  $region4: #{heart_chamber.1} parent=0 // pred_region
    _
  $region5: #{heart_chamber.1} parent=0 // pred_fallthru
    _
  %v8 = vld [vmem:[%s0] sm:$0xff]
  %s9 = scalar_lea.vmem %s0, 8
  %v10 = vld [vmem:[%s9] sm:$0xff]
  %s11 = scalar_lea.vmem %s0, 16
  %v12 = vld [vmem:[%s11] sm:$0xff]
  %v13 = vsub.f32 0.0, %v12
  %s14 = scalar_lea.vmem %s1, 8
  %15 = vst [vmem:[%s14] sm:$0xff] %v13
  %s16 = scalar_lea.vmem %s1, 16
  %17 = vst [vmem:[%s16] sm:$0xff] %v8
  %s18 = scalar_lea.vmem %s1, 24
  %19 = vst [vmem:[%s18] sm:$0xff] %v10
  %v20 = vmax.f32 %v13, 0.0
  %v21 = vmul.f32 %v20, %v20
  %v22 = vsub.f32 1.0, %v21
  %v23 = vmul.f32 %v8, %v8
  %v24 = vsub.f32 %v22, %v23
  %v25 = vmul.f32 %v10, %v10
  %v26 = vsub.f32 %v24, %v25
  %s27 = scalar_lea.vmem %s1, 56
  %28 = vst [vmem:[%s27] sm:$0xff] %v22
  %29 = vst [vmem:[%s1] sm:$0xff] %v26
  %v30 = vmul.f32 %v13, 0.5
  %v31 = vmul.f32 %v30, 0.5
  %v32 = vsub.f32 0.0, %v13
  %v33 = vmul.f32 %v32, 0.5
  %v34 = vmax.f32 %v33, 0.0
  %v35 = vmul.f32 %v34, %v34
  %s36 = scalar_lea.vmem %s1, 64
  %37 = vst [vmem:[%s36] sm:$0xff] %v35
  %v38 = vsub.f32 1.0, %v35
  %v39 = vmul.f32 %v38, 0.75
  %v40 = vadd.f32 %v39, 0.25
  %v41 = vrcp.pop %v40
  %v42 = vmul.f32 1.0, %v41
  %v43 = vmul.f32 %v42, %v42
  %v44 = vsub.f32 %v8, %v31
  %v45 = vmul.f32 %v44, %v42
  %v46 = vsub.f32 1.0, %v45
  %v47 = vmul.f32 %v46, 10.0
  %vm48 = vcmp.gt.f32.partialorder %v47, 2.0
  %v49 = vmin.f32 %v47, 2.0
  %v50 = vmul.f32 %v49, 1.442695
  %v51 = vpow.pop %v50
  %v52 = vadd.f32 %v51, 1.0
  %v53 = vlog2.pop %v52
  %v54 = vmul.f32 %v53, 0.6931472
  %v55 = vmul.f32 -0.5, %v51
  %v56 = vadd.f32 %v55, 1.0
  %v57 = vmul.f32 %v56, %v51
  %v58 = vand.u32 2147483647, %v51
  %vm59 = vcmp.lt.f32.partialorder %v58, 0.0004427343
  %v60 = vsel %vm59, %v57, %v54
  %v61 = vrcp.pop 10.0
  %v62 = vmul.f32 %v60, %v61
  %v63 = vsel %vm48, %v46, %v62
  %v64 = vsub.f32 2.0, %v63
  %v65 = vmul.f32 %v64, 10.0
  %vm66 = vcmp.gt.f32.partialorder %v65, 2.0
  %v67 = vmin.f32 %v65, 2.0
  %v68 = vmul.f32 %v67, 1.442695
  %v69 = vpow.pop %v68
  %v70 = vadd.f32 %v69, 1.0
  %v71 = vlog2.pop %v70
  %v72 = vmul.f32 %v71, 0.6931472
  %v73 = vmul.f32 -0.5, %v69
  %v74 = vadd.f32 %v73, 1.0
  %v75 = vmul.f32 %v74, %v69
  %v76 = vand.u32 2147483647, %v69
  %vm77 = vcmp.lt.f32.partialorder %v76, 0.0004427343
  %v78 = vsel %vm77, %v75, %v72
  %v79 = vmul.f32 %v78, %v61
  %v80 = vsel %vm66, %v64, %v79
  %v81 = vsub.f32 %v80, 1.0
  %v82 = vmul.f32 %v10, %v42
  %v83 = vsub.f32 1.0, %v82
  %v84 = vmul.f32 %v83, 10.0
  %vm85 = vcmp.gt.f32.partialorder %v84, 2.0
  %v86 = vmin.f32 %v84, 2.0
  %v87 = vmul.f32 %v86, 1.442695
  %v88 = vpow.pop %v87
  %v89 = vadd.f32 %v88, 1.0
  %v90 = vlog2.pop %v89
  %v91 = vmul.f32 %v90, 0.6931472
  %v92 = vmul.f32 -0.5, %v88
  %v93 = vadd.f32 %v92, 1.0
  %v94 = vmul.f32 %v93, %v88
  %v95 = vand.u32 2147483647, %v88
  %vm96 = vcmp.lt.f32.partialorder %v95, 0.0004427343
  %v97 = vsel %vm96, %v94, %v91
  %v98 = vmul.f32 %v97, %v61
  %v99 = vsel %vm85, %v83, %v98
  %v100 = vsub.f32 2.0, %v99
  %v101 = vmul.f32 %v100, 10.0
  %vm102 = vcmp.gt.f32.partialorder %v101, 2.0
  %v103 = vmin.f32 %v101, 2.0
  %v104 = vmul.f32 %v103, 1.442695
  %v105 = vpow.pop %v104
  %v106 = vadd.f32 %v105, 1.0
  %v107 = vlog2.pop %v106
  %v108 = vmul.f32 %v107, 0.6931472
  %v109 = vmul.f32 -0.5, %v105
  %v110 = vadd.f32 %v109, 1.0
  %v111 = vmul.f32 %v110, %v105
  %v112 = vand.u32 2147483647, %v105
  %vm113 = vcmp.lt.f32.partialorder %v112, 0.0004427343
  %v114 = vsel %vm113, %v111, %v108
  %v115 = vmul.f32 %v114, %v61
  %v116 = vsel %vm102, %v100, %v115
  %v117 = vsub.f32 %v116, 1.0
  %s118 = scalar_lea.vmem %s1, 32
  %119 = vst [vmem:[%s118] sm:$0xff] %v81
  %s120 = scalar_lea.vmem %s1, 40
  %121 = vst [vmem:[%s120] sm:$0xff] %v117
  %s122 = scalar_lea.vmem %s1, 48
  %123 = vst [vmem:[%s122] sm:$0xff] %v81
  %v124 = vmul.f32 %v25, %v43
  %v125 = vmul.f32 %v44, %v44
  %v126 = vadd.f32 %v125, %v124
  %v127 = vmul.f32 %v126, %v126
  %v128 = vmul.f32 %v127, %v127
  %v129 = vsub.f32 1.0, %v128
  %v130 = vmul.f32 %v129, 10.0
  %vm131 = vcmp.gt.f32.partialorder %v130, 2.0
  %v132 = vmin.f32 %v130, 2.0
  %v133 = vmul.f32 %v132, 1.442695
  %v134 = vpow.pop %v133
  %v135 = vadd.f32 %v134, 1.0
  %v136 = vlog2.pop %v135
  %v137 = vmul.f32 %v136, 0.6931472
  %v138 = vmul.f32 -0.5, %v134
  %v139 = vadd.f32 %v138, 1.0
  %v140 = vmul.f32 %v139, %v134
  %v141 = vand.u32 2147483647, %v134
  %vm142 = vcmp.lt.f32.partialorder %v141, 0.0004427343
  %v143 = vsel %vm142, %v140, %v137
  %v144 = vmul.f32 %v143, %v61
  %v145 = vsel %vm131, %v129, %v144
  %v146 = vsub.f32 1.0, %v145
  %v147 = vadd.f32 %v8, %v31
  %v148 = vmul.f32 %v147, %v147
  %v149 = vadd.f32 %v148, %v124
  %v150 = vmul.f32 %v149, %v149
  %v151 = vmul.f32 %v150, %v150
  %v152 = vsub.f32 1.0, %v151
  %v153 = vmul.f32 %v152, 10.0
  %vm154 = vcmp.gt.f32.partialorder %v153, 2.0
  %v155 = vmin.f32 %v153, 2.0
  %v156 = vmul.f32 %v155, 1.442695
  %v157 = vpow.pop %v156
  %v158 = vadd.f32 %v157, 1.0
  %v159 = vlog2.pop %v158
  %v160 = vmul.f32 %v159, 0.6931472
  %v161 = vmul.f32 -0.5, %v157
  %v162 = vadd.f32 %v161, 1.0
  %v163 = vmul.f32 %v162, %v157
  %v164 = vand.u32 2147483647, %v157
  %vm165 = vcmp.lt.f32.partialorder %v164, 0.0004427343
  %v166 = vsel %vm165, %v163, %v160
  %v167 = vmul.f32 %v166, %v61
  %v168 = vsel %vm154, %v152, %v167
  %v169 = vsub.f32 1.0, %v168
  %v170 = vsub.f32 1.0, %v26
  %v171 = vmul.f32 %v170, %v170
  %v172 = vmul.f32 %v171, %v171
  %v173 = vsub.f32 1.0, %v172
  %v174 = vmul.f32 %v35, %v35
  %v175 = vmul.f32 %v174, %v174
  %v176 = vmul.f32 %v175, %v146
  %v177 = vmul.f32 %v176, %v169
  %v178 = vsub.f32 1.0, %v177
  %v179 = vmul.f32 %v173, %v178
  %s180 = scalar_lea.vmem %s1, 72
  %181 = vst [vmem:[%s180] sm:$0xff] %v179
  // Predicated region
  $region6: #{heart_chamber.1} parent=0 // pred_check
    _
  $region7: #{heart_chamber.1} parent=0 // pred_check_branch
    %183 = sbr.rel (0) target = $region9
  $region8: #{heart_chamber.1} parent=0 // pred_region
    _
  $region9: #{heart_chamber.1} parent=0 // pred_fallthru
    _
  // Predicated region
  $region10: #{heart_chamber.1} parent=0 // pred_check
    _
  $region11: #{heart_chamber.1} parent=0 // pred_check_branch
    %185 = sbr.rel (0) target = $region13
  $region12: #{heart_chamber.1} parent=0 // pred_region
    _
  $region13: #{heart_chamber.1} parent=0 // pred_fallthru
    _

</llo_original>
